<compile_context>
chip_gen: v5e
topology: v5e:2x2
jax: 0.10.0
libtpu: 0.0.40
codegen_flags: <defaults>
</compile_context>

<pallas_src>
import functools

import jax
import jax.numpy as jnp
from jax import lax
from jax.experimental import pallas as pl
from jax.experimental.pallas import tpu as pltpu


def _vmem_capacity_bytes():
    try:
        return int(pltpu.get_tpu_info().vmem_capacity_bytes)
    except Exception:
        return 64 << 20  # conservative fallback (v7x per-TC VMEM)


# ---------------------------------------------------------------------------
# Kernel 1: mod = x @ W + b, tiled over output columns.
#   x : (2B, D)  SiLU already applied (hoisted) and cast to the weight dtype;
#                rows [0:B) = emb, rows [B:2B) = token_replace_emb.
#   W : (D, 3D)  (transposed torch nn.Linear weight), b : (1, 3D)
# ---------------------------------------------------------------------------
def _mod_linear_kernel(x_ref, w_ref, b_ref, out_ref):
    acc = jnp.dot(x_ref[...], w_ref[...], preferred_element_type=jnp.float32)
    out_ref[...] = acc + b_ref[...].astype(jnp.float32)


# ---------------------------------------------------------------------------
# Kernel 2: fused LayerNorm (no affine, eps=1e-6) + token-replace modulation.
#   h_ref    : (1, ts, D) hidden tile
#   mods_ref : (1, 4, D) f32 = [shift, 1+scale, tr_shift, 1+tr_scale]
# Tile-level specialization on the static boundary: only the (at most one)
# boundary tile per batch pays for the per-row select.
# ---------------------------------------------------------------------------
def _norm_modulate_kernel(h_ref, mods_ref, out_ref, *, first_frame_tokens, tile_s):
    x = h_ref[...].astype(jnp.float32)                     # (1, ts, D)
    d = x.shape[-1]
    inv_d = 1.0 / d
    mean = jnp.sum(x, axis=-1, keepdims=True) * inv_d
    ex2 = jnp.sum(x * x, axis=-1, keepdims=True) * inv_d
    var = jnp.maximum(ex2 - mean * mean, 0.0)
    xn = (x - mean) * lax.rsqrt(var + 1e-6)

    m = mods_ref[...].astype(jnp.float32)                  # (1, 4, D)
    shift, scale1 = m[:, 0:1, :], m[:, 1:2, :]             # scale1 = 1 + scale
    tr_shift, tr_scale1 = m[:, 2:3, :], m[:, 3:4, :]

    fft = first_frame_tokens
    tile_start = pl.program_id(1) * tile_s
    tile_end = tile_start + tile_s

    @pl.when(tile_end <= fft)
    def _():  # tile entirely in the token-replace (first-frame) region
        out_ref[...] = (xn * tr_scale1 + tr_shift).astype(out_ref.dtype)

    @pl.when(tile_start >= fft)
    def _():  # tile entirely in the regular region
        out_ref[...] = (xn * scale1 + shift).astype(out_ref.dtype)

    @pl.when(jnp.logical_and(tile_start < fft, tile_end > fft))
    def _():  # single boundary tile: per-row select
        pos = tile_start + lax.broadcasted_iota(jnp.int32, (1, tile_s, 1), 1)
        use_tr = pos < fft
        out_ref[...] = (xn * jnp.where(use_tr, tr_scale1, scale1)
                        + jnp.where(use_tr, tr_shift, shift)).astype(out_ref.dtype)


def hunyuan_token_replace_ada_ln_zero_single(
    hidden_states, emb, token_replace_emb, first_frame_num_tokens,
    linear_weight, linear_bias, *, seq_block=None):
    """
    hidden_states      : (B, S, D)
    emb                : (B, D)
    token_replace_emb  : (B, D)
    linear_weight      : (D, 3D)  -- transposed torch nn.Linear weight
    linear_bias        : (3D,)
    Returns (hidden_states (B,S,D), gate_msa (B,D), tr_gate_msa (B,D)).
    """
    B, S, D = hidden_states.shape
    D3 = 3 * D
    assert linear_weight.shape == (D, D3)
    assert linear_bias.shape == (D3,)
    fft = int(first_frame_num_tokens)
    vmem_cap = _vmem_capacity_bytes()

    # ---- modulation projections: both embeddings in one matmul -------------
    # SiLU hoisted out of the column-tile loop (tiny (2B, D) operand).
    x = jnp.concatenate([emb, token_replace_emb], axis=0).astype(jnp.float32)
    x = (x * jax.nn.sigmoid(x)).astype(linear_weight.dtype)        # (2B, D)
    bias2d = linear_bias.reshape(1, D3)

    tn_pref = 3072 if vmem_cap >= (96 << 20) else 1536
    tn = D3 if D3 <= tn_pref else tn_pref                 # full dim or x128 tile
    n_col = pl.cdiv(D3, tn)

    wbytes = jnp.dtype(linear_weight.dtype).itemsize
    xbytes = jnp.dtype(x.dtype).itemsize
    mod_vmem = (2 * D * tn * wbytes                        # weight tile, 2 bufs
                + 2 * 2 * B * tn * 4                       # f32 out tile, 2 bufs
                + 2 * 2 * B * D * xbytes                   # LHS block
                + 2 * tn * jnp.dtype(linear_bias.dtype).itemsize)
    mod_vmem = int(min(max(mod_vmem + (4 << 20), 32 << 20), vmem_cap))

    mod = pl.pallas_call(
        _mod_linear_kernel,
        out_shape=jax.ShapeDtypeStruct((2 * B, D3), jnp.float32),
        grid=(n_col,),
        in_specs=[
            pl.BlockSpec((2 * B, D), lambda j: (0, 0)),
            pl.BlockSpec((D, tn), lambda j: (0, j)),
            pl.BlockSpec((1, tn), lambda j: (0, j)),
        ],
        out_specs=pl.BlockSpec((2 * B, tn), lambda j: (0, j)),
        compiler_params=pltpu.CompilerParams(
            dimension_semantics=("parallel",),
            vmem_limit_bytes=mod_vmem),
    )(x, linear_weight, bias2d)

    mod3 = mod.reshape(2 * B, 3, D)                        # chunk(3, dim=1)
    shift, scale, gate = mod3[:B, 0], mod3[:B, 1], mod3[:B, 2]
    tr_shift, tr_scale, tr_gate = mod3[B:, 0], mod3[B:, 1], mod3[B:, 2]

    # Tiny f32 slab consumed once per sequence tile; '1+scale' baked in.
    mods = jnp.stack([shift, 1.0 + scale, tr_shift, 1.0 + tr_scale], axis=1)

    # ---- fused LayerNorm + modulation over sequence tiles -------------------
    hbytes = jnp.dtype(hidden_states.dtype).itemsize
    ts_pref = 1024 if vmem_cap >= (96 << 20) else 512
    if seq_block is not None and (seq_block == S or seq_block % 8 == 0):
        ts = min(int(seq_block), S)
    else:
        ts = S if S <= ts_pref else ts_pref
    n_seq = pl.cdiv(S, ts)

    norm_vmem = (2 * ts * D * hbytes * 2                   # in + out, 2 bufs each
                 + 2 * 4 * D * 4                           # mods block, 2 bufs
                 + 3 * ts * D * 4)                         # f32 intermediates
    norm_vmem = int(min(max(norm_vmem + (4 << 20), 32 << 20), vmem_cap))

    kernel = functools.partial(
        _norm_modulate_kernel, first_frame_tokens=fft, tile_s=ts)

    out = pl.pallas_call(
        kernel,
        out_shape=jax.ShapeDtypeStruct((B, S, D), hidden_states.dtype),
        grid=(B, n_seq),
        in_specs=[
            pl.BlockSpec((1, ts, D), lambda b, s: (b, s, 0)),
            pl.BlockSpec((1, 4, D), lambda b, s: (b, 0, 0)),
        ],
        out_specs=pl.BlockSpec((1, ts, D), lambda b, s: (b, s, 0)),
        compiler_params=pltpu.CompilerParams(
            dimension_semantics=("parallel", "parallel"),
            vmem_limit_bytes=norm_vmem),
    )(hidden_states, mods)

    return out, gate.astype(emb.dtype), tr_gate.astype(emb.dtype)


# ---------------------------------------------------------------------------
# Plain-JAX reference (torch semantics), computed in f32.
# ---------------------------------------------------------------------------
def reference(hidden, emb, tr_emb, fft, W, b):
    def silu(v):
        return v * jax.nn.sigmoid(v)

    Wf, bf = W.astype(jnp.float32), b.astype(jnp.float32)
    e = silu(emb.astype(jnp.float32)) @ Wf + bf
    t = silu(tr_emb.astype(jnp.float32)) @ Wf + bf
    shift, scale, gate = jnp.split(e, 3, axis=1)
    tr_shift, tr_scale, tr_gate = jnp.split(t, 3, axis=1)

    x = hidden.astype(jnp.float32)
    mean = x.mean(-1, keepdims=True)
    var = ((x - mean) ** 2).mean(-1, keepdims=True)
    xn = (x - mean) / jnp.sqrt(var + 1e-6)
    hz = xn[:, :fft] * (1.0 + tr_scale[:, None]) + tr_shift[:, None]
    ho = xn[:, fft:] * (1.0 + scale[:, None]) + shift[:, None]
    return jnp.concatenate([hz, ho], axis=1), gate, tr_gate


def _check(got, ref, rtol, atol):
    for g, r in zip(got, ref):
        assert jnp.allclose(g.astype(jnp.float32), r, rtol=rtol, atol=atol)


if __name__ == "__main__":
    B, S, D = 2, 16, 32          # batch, sequence length, embedding_dim
    key = jax.random.PRNGKey(0)
    k = jax.random.split(key, 6)
    hidden = jax.random.normal(k[0], (B, S, D), jnp.float32)
    emb = jax.random.normal(k[1], (B, D), jnp.float32)
    tr_emb = jax.random.normal(k[2], (B, D), jnp.float32)
    W = jax.random.normal(k[3], (D, 3 * D), jnp.float32) * 0.05
    b = jax.random.normal(k[4], (3 * D,), jnp.float32) * 0.05

    # ---- f32, FFT crosses a sequence tile (boundary + regular branches) ----
    FFT = 5
    got = jax.block_until_ready(hunyuan_token_replace_ada_ln_zero_single(
        hidden, emb, tr_emb, FFT, W, b, seq_block=8))
    _check(got, reference(hidden, emb, tr_emb, FFT, W, b), 2e-3, 2e-3)

    # ---- f32, FFT=12 (all-token-replace tile + boundary tile) --------------
    FFT2 = 12
    got = jax.block_until_ready(hunyuan_token_replace_ada_ln_zero_single(
        hidden, emb, tr_emb, FFT2, W, b, seq_block=8))
    _check(got, reference(hidden, emb, tr_emb, FFT2, W, b), 2e-3, 2e-3)

    # ---- f32, ragged sequence length (cdiv grid, masked last block) --------
    S2, FFT3 = 20, 9
    hidden2 = jax.random.normal(k[5], (B, S2, D), jnp.float32)
    got = jax.block_until_ready(hunyuan_token_replace_ada_ln_zero_single(
        hidden2, emb, tr_emb, FFT3, W, b, seq_block=8))
    _check(got, reference(hidden2, emb, tr_emb, FFT3, W, b), 2e-3, 2e-3)

    # ---- bf16 weights/activations (production dtype): f32 accumulation -----
    hb, eb, tb = (v.astype(jnp.bfloat16) for v in (hidden, emb, tr_emb))
    Wb, bb = W.astype(jnp.bfloat16), b.astype(jnp.bfloat16)
    got = jax.block_until_ready(hunyuan_token_replace_ada_ln_zero_single(
        hb, eb, tb, FFT, Wb, bb, seq_block=8))
    _check(got, reference(hb, eb, tb, FFT, Wb, bb), 2e-2, 2e-2)

    print("KERNEL_OK")
</pallas_src>

<mosaic_0001>
module attributes {stable_mosaic.version = 11 : i64} {
  func.func @_mod_linear_kernel(%arg0: i32, %arg1: memref<4x32xf32, #tpu.memory_space<vmem>>, %arg2: memref<32x96xf32, #tpu.memory_space<vmem>>, %arg3: memref<1x96xf32, #tpu.memory_space<vmem>>, %arg4: memref<4x96xf32, #tpu.memory_space<vmem>>) attributes {dimension_semantics = [#tpu.dimension_semantics<parallel>], iteration_bounds = array<i64: 1>, scalar_prefetch = 0 : i64, scratch_operands = 0 : i64, tpu.core_type = #tpu.core_type<tc>, window_params = [{pipeline_mode = #tpu.pipeline_mode<synchronous>, transform_indices = @transform_0, window_bounds = array<i64: 4, 32>}, {transform_indices = @transform_1, window_bounds = array<i64: 32, 96>}, {transform_indices = @transform_2, window_bounds = array<i64: 1, 96>}, {transform_indices = @transform_3, window_bounds = array<i64: 4, 96>}]} {
    %c0 = arith.constant 0 : index
    %c0_0 = arith.constant 0 : index
    %0 = vector.load %arg1[%c0, %c0_0] : memref<4x32xf32, #tpu.memory_space<vmem>>, vector<4x32xf32>
    %c0_1 = arith.constant 0 : index
    %c0_2 = arith.constant 0 : index
    %1 = vector.load %arg2[%c0_1, %c0_2] : memref<32x96xf32, #tpu.memory_space<vmem>>, vector<32x96xf32>
    %cst = arith.constant dense<0.000000e+00> : vector<4x96xf32>
    %2 = tpu.matmul %0, %1, %cst {dimension_numbers = #tpu.dot_dimension_numbers<[1], [0], [0], [1], [0, 0, 1, 1], [], []>} : vector<4x32xf32>, vector<32x96xf32>, vector<4x96xf32> -> vector<4x96xf32>
    %c0_3 = arith.constant 0 : index
    %c0_4 = arith.constant 0 : index
    %3 = vector.load %arg3[%c0_3, %c0_4] : memref<1x96xf32, #tpu.memory_space<vmem>>, vector<1x96xf32>
    %4 = vector.broadcast %3 : vector<1x96xf32> to vector<4x96xf32>
    %5 = arith.addf %2, %4 : vector<4x96xf32>
    %c0_5 = arith.constant 0 : index
    %c0_6 = arith.constant 0 : index
    %6 = vector.load %arg4[%c0_5, %c0_6] : memref<4x96xf32, #tpu.memory_space<vmem>>, vector<4x96xf32>
    tpu.vector_store %arg4[%c0_5, %c0_6], %5 {strides = array<i32>} : memref<4x96xf32, #tpu.memory_space<vmem>>, vector<4x96xf32>,
    return
  }
  func.func @transform_0(%arg0: i32) -> (i32, i32) {
    %c0_i32 = arith.constant 0 : i32
    %c0_i32_0 = arith.constant 0 : i32
    %c0_i32_1 = arith.constant 0 : i32
    return %c0_i32, %c0_i32_0 : i32, i32
  }
  func.func @transform_1(%arg0: i32) -> (i32, i32) {
    %c0_i32 = arith.constant 0 : i32
    %c0_i32_0 = arith.constant 0 : i32
    return %c0_i32, %arg0 : i32, i32
  }
  func.func @transform_2(%arg0: i32) -> (i32, i32) {
    %c0_i32 = arith.constant 0 : i32
    %c0_i32_0 = arith.constant 0 : i32
    return %c0_i32, %arg0 : i32, i32
  }
  func.func @transform_3(%arg0: i32) -> (i32, i32) {
    %c0_i32 = arith.constant 0 : i32
    %c0_i32_0 = arith.constant 0 : i32
    return %c0_i32, %arg0 : i32, i32
  }
}

</mosaic_0001>

<llo_original>
// kernel: tpu_custom_call.1
$region0: #{tpu_custom_call.1}
  #allocation0 [shape = 'u32[]', space=smem, size = 0x4, offset = 0x4, fixed_abs, tag = 'smem constant byte address 0x4 - core index']
  #allocation1 [shape = 'u32[72,128]{1,0:T(1,128)}', space=vmem, size = 0x9000, scoped, tag = 'internal scratch']
  %s0 = inlined_call_operand.hbm [shape: f32[4,32], index: 0, kind: input, shape index: {}]
  %s1 = inlined_call_operand.hbm [shape: f32[32,96], index: 1, kind: input, shape index: {}]
  %s2 = inlined_call_operand.vmem [shape: f32[1,96], index: 2, kind: input, shape index: {}]
  %s3 = inlined_call_operand.hbm [shape: f32[4,96], index: 3, kind: output, shape index: {}]
  %s4 = sld [smem:[#allocation0]]
  $region30: #{tpu_custom_call.1} parent=0
    _
  %s6 = ssub.s32 1, %s4
  %s7 = scalar_select 0, %s6, %s4
  $region1: #{tpu_custom_call.1} parent=0
    #allocation2 [shape = 'u8[2048]{0}', space=vmem, size = 0x800, scoped, tag = 'input window, operand 0, single buffered']
    #allocation3 [shape = 's32[1]{0}', space=sflag, size = 0x4, scoped, tag = 'scoped memory for tpu_custom_call.1']
    #allocation4 [shape = 's32[1]{0}', space=sflag, size = 0x4, scoped, tag = 'scoped memory for tpu_custom_call.1']
    #allocation5 [shape = 'u8[16384]{0}', space=vmem, size = 0x4000, scoped, tag = 'input window, operand 1, single buffered']
    #allocation6 [shape = 's32[1]{0}', space=sflag, size = 0x4, scoped, tag = 'scoped memory for tpu_custom_call.1']
    #allocation7 [shape = 'u8[2048]{0}', space=vmem, size = 0x800, scoped, tag = 'output window, operand 0, single buffered']
    %8 = vsyncpa [#allocation3], 0
    %9 = vsyncpa [#allocation6], 0
    %10 = vsyncpa [#allocation4], 0
    // Predicated region
    $region2: #{tpu_custom_call.1} parent=1 // pred_check
      _
    $region3: #{tpu_custom_call.1} parent=1 // pred_check_branch
      %12 = sbr.rel (0) target = $region5
    $region4: #{tpu_custom_call.1} parent=1 // pred_region
      %14 = vsyncadd [#allocation3], 0
      %s16 = sshll.u32 %s0, 4
      %s17 = int_to_ptr.hbm [resolvable:$true] %s16
      %s18 = sshll.u32 [#allocation2], 4
      %s19 = int_to_ptr.vmem [resolvable:$true] %s18
      %21 = dma.hbm_to_vmem [thread:$0]  %s17, 64, %s19, [#allocation3]
    $region5: #{tpu_custom_call.1} parent=1 // pred_fallthru
      _
    // Predicated region
    $region6: #{tpu_custom_call.1} parent=1 // pred_check
      _
    $region7: #{tpu_custom_call.1} parent=1 // pred_check_branch
      %23 = sbr.rel (0) target = $region9
    $region8: #{tpu_custom_call.1} parent=1 // pred_region
      %25 = vsyncadd [#allocation6], 0
      %s26 = sshll.u32 %s1, 4
      %s27 = int_to_ptr.hbm [resolvable:$true] %s26
      %s28 = sshll.u32 [#allocation5], 4
      %s29 = int_to_ptr.vmem [resolvable:$true] %s28
      %34 = dma.hbm_to_vmem [thread:$0]  %s27, 512, %s29, [#allocation6], 128, 128, 8
    $region9: #{tpu_custom_call.1} parent=1 // pred_fallthru
      _
    // Predicated region
    $region10: #{tpu_custom_call.1} parent=1 // pred_check
      _
    $region11: #{tpu_custom_call.1} parent=1 // pred_check_branch
      %36 = sbr.rel (0) target = $region13
    $region12: #{tpu_custom_call.1} parent=1 // pred_region
      _
    $region13: #{tpu_custom_call.1} parent=1 // pred_fallthru
      _
    // Predicated region
    $region14: #{tpu_custom_call.1} parent=1 // pred_check
      _
    $region15: #{tpu_custom_call.1} parent=1 // pred_check_branch
      %38 = sbr.rel (0) target = $region17
    $region16: #{tpu_custom_call.1} parent=1 // pred_region
      %40 = dma.done [#allocation3], 64
    $region17: #{tpu_custom_call.1} parent=1 // pred_fallthru
      _
    // Predicated region
    $region18: #{tpu_custom_call.1} parent=1 // pred_check
      _
    $region19: #{tpu_custom_call.1} parent=1 // pred_check_branch
      %42 = sbr.rel (0) target = $region21
    $region20: #{tpu_custom_call.1} parent=1 // pred_region
      %44 = dma.done [#allocation6], 512
    $region21: #{tpu_custom_call.1} parent=1 // pred_fallthru
      _
    %v45 = vld [vmem:[#allocation2] sm:$0xf]
    %v46 = vld [vmem:[#allocation5] sm:$0xff]
    %v47 = vld [vmem:[#allocation5 + $0x8] sm:$0xff]
    %v48 = vld [vmem:[#allocation5 + $0x10] sm:$0xff]
    %v49 = vld [vmem:[#allocation5 + $0x18] sm:$0xff]
    %v50 = vld [vmem:[%s2] sm:$0x1]
    %v52 = vperm.slane %v50, 0
    %vm54 = vcmask 261120
    %v56 = vsel %vm54, %v45, 0
    %58 = vmatpush.msra.mxu0 0.0
    %59 = vmatpush.msra.mxu0 0.0
    %60 = vmatpush.msra.mxu0 0.0
    %61 = vmatpush.msra.mxu0 0.0
    %62 = vmatpush.msra.mxu0 0.0
    %63 = vmatpush.msra.mxu0 0.0
    %64 = vmatpush.msra.mxu0 0.0
    %65 = vmatpush.msra.mxu0 0.0
    %66 = vmatpush.msra.mxu0 0.0
    %67 = vmatpush.msra.mxu0 0.0
    %68 = vmatpush.msra.mxu0 0.0
    %69 = vmatpush.msra.mxu0 0.0
    %70 = vmatpush.msra.mxu0 %v49
    %71 = vmatpush.msra.mxu0 %v48
    %72 = vmatpush.msra.mxu0 %v47
    %73 = vmatpush.msra.mxu0 %v46
    %74 = vmatmul.f32.gmra.mxu0 %v56
    %v75 = vpop.f32.mrf.mxu0
    %v76 = vadd.f32 %v52, %v75
    %77 = vdwg.mxu0
    %vm78 = vcmask 781312
    %79 = vst.msk [vmem:[#allocation7] sm:$0xf] %vm78, %v76
    // Predicated region
    $region22: #{tpu_custom_call.1} parent=1 // pred_check
      _
    $region23: #{tpu_custom_call.1} parent=1 // pred_check_branch
      %81 = sbr.rel (0) target = $region25
    $region24: #{tpu_custom_call.1} parent=1 // pred_region
      %83 = vsyncadd [#allocation4], 0
      %s85 = sshll.u32 [#allocation7], 4
      %s86 = int_to_ptr.vmem [resolvable:$true] %s85
      %s87 = sshll.u32 %s3, 4
      %s88 = int_to_ptr.hbm [resolvable:$true] %s87
      %90 = dma.vmem_to_hbm [thread:$0]  %s86, 64, %s88, [#allocation4]
    $region25: #{tpu_custom_call.1} parent=1 // pred_fallthru
      _
    // Predicated region
    $region26: #{tpu_custom_call.1} parent=1 // pred_check
      _
    $region27: #{tpu_custom_call.1} parent=1 // pred_check_branch
      %92 = sbr.rel (0) target = $region29
    $region28: #{tpu_custom_call.1} parent=1 // pred_region
      %94 = dma.done [#allocation4], 64
    $region29: #{tpu_custom_call.1} parent=1 // pred_fallthru
      _
    %95 = vsyncpa [#allocation3], 1
    %96 = vsyncpa [#allocation6], 1
    %97 = vsyncpa [#allocation4], 1

</llo_original>
